<compile_context>
chip_gen: v6e
topology: v6e:2x2x1
jax: 0.10.0
libtpu: 0.0.40
codegen_flags: <defaults>
</compile_context>

<pallas_src>
import functools

import jax
import jax.numpy as jnp
from jax import lax
from jax.experimental import pallas as pl
from jax.experimental.pallas import tpu as pltpu

_CHUNK = 128  # lanes per in-kernel chunk (one vreg width)


def _classifier_kernel(x_ref, wb_ref, bb_ref, wcls_ref, bcls_ref,
                       out_ref, acc_ref, *, hw_total, tile_hw, mask_tail):
    """One grid step == (batch tile i, spatial tile k).

    x_ref    : (1, TILE_B, C, TILE_HW)  image slab, HW on lanes (zero padded)
    wb_ref   : (C, F, 128)     encoder pointwise weight, lane-pre-broadcast
    bb_ref   : (F, 128)        encoder bias, lane-pre-broadcast
    wcls_ref : (F, NC_PAD)     classifier weight^T, pre-scaled by 1/HW
    bcls_ref : (1, NC_PAD)     classifier bias (zero padded)
    out_ref  : (1, TILE_B, NC_PAD)  logits block (lane dense)
    acc_ref  : (TILE_B, F, 128) f32 lane-partial running spatial sum
    """
    k = pl.program_id(1)
    num_ch = wb_ref.shape[0]
    n_chunks = tile_hw // _CHUNK

    @pl.when(k == 0)
    def _init():
        acc_ref[...] = jnp.zeros_like(acc_ref)

    def chunk_body(j, carry):
        off = pl.multiple_of(j * _CHUNK, _CHUNK)
        xc = x_ref[0, :, :, pl.ds(off, _CHUNK)].astype(jnp.float32)
        # Fused C broadcast-MACs + bias + ReLU on one (TILE_B, F, 128) chunk:
        # pure VPU work, ~32 vregs live -> no spills.
        h = wb_ref[0][None] * xc[:, 0:1, :]
        for c in range(1, num_ch):
            h = h + wb_ref[c][None] * xc[:, c:c + 1, :]
        h = jnp.maximum(h + bb_ref[...][None], 0.0)
        if mask_tail:
            # Zero padded pixels AFTER the ReLU so ReLU(bias) does not leak
            # into the pooled sum.
            pix = (k * tile_hw + off
                   + lax.broadcasted_iota(jnp.int32, h.shape, 2))
            h = jnp.where(pix < hw_total, h, 0.0)
        acc_ref[...] += h            # lane-partial accumulate: VPU adds only
        return carry

    lax.fori_loop(0, n_chunks, chunk_body, 0, unroll=True)

    @pl.when(k == pl.num_programs(1) - 1)
    def _finalize():
        # Single cross-lane reduce per batch tile (XLU), then the classifier
        # matmul on the MXU.  1/HW is folded into wcls in the wrapper.
        feat = jnp.sum(acc_ref[...], axis=2)                    # (TILE_B, F)
        pred = jnp.dot(feat, wcls_ref[...],
                       preferred_element_type=jnp.float32) + bcls_ref[...]
        out_ref[0] = pred.astype(out_ref.dtype)


def pretrained_image_classifier(x_nchw, w_enc, b_enc, w_cls, b_cls):
    """x_nchw: (B, C, H, W). Returns logits (B, num_cls) in float32."""
    B, C, H, W = x_nchw.shape
    F = w_enc.shape[1]
    NC = w_cls.shape[0]                      # nn.Linear weight is (num_cls, F)
    HW = H * W

    # ---- batch tiling: >= 2 tiles on the "parallel" axis whenever B > 1 so
    # both v7x TensorCores get work; cap at 8 rows so the per-chunk working
    # set stays ~32 vregs.
    if B >= 16:
        tile_b = 8
    else:
        tile_b = max(1, (B + 1) // 2)
    n_b = pl.cdiv(B, tile_b)
    b_pad = n_b * tile_b

    # ---- spatial tiling: large lane-aligned BlockSpec tile (long DMA runs,
    # few grid steps); fine granularity lives in the in-kernel 128-lane chunk
    # loop.  2048-lane cap keeps the double-buffered x block small enough for
    # v7x's smaller VMEM.
    max_tile_hw = 2048
    tile_hw = min(pl.cdiv(HW, _CHUNK) * _CHUNK, max_tile_hw)
    n_hw = pl.cdiv(HW, tile_hw)
    hw_pad = n_hw * tile_hw
    mask_tail = hw_pad != HW

    # ---- layout glue: zero-copy reshape (NCHW-native, HW on lanes), pad only
    # where needed, split the batch into (n_b, tile_b) so every block shape
    # equals the corresponding array dims.
    x = x_nchw.reshape(B, C, HW)
    if b_pad != B or hw_pad != HW:
        x = jnp.pad(x, ((0, b_pad - B), (0, 0), (0, hw_pad - HW)))
    x = x.reshape(n_b, tile_b, C, hw_pad)
    # NOTE: the kernel casts to f32 internally, so x may be fed as bf16 to
    # halve input DMA bytes on v6e/v7x (kept f32 here for the 1e-4 check).

    # Lane-dense classifier output: pad NC up to a multiple of 128.
    nc_pad = pl.cdiv(NC, 128) * 128

    # Encoder weight/bias pre-broadcast across the 128-lane chunk width so the
    # kernel's chunk loop has no lane broadcasts (hoisted to the wrapper).
    w_enc_b = jnp.broadcast_to(w_enc.astype(jnp.float32)[:, :, None],
                               (C, F, _CHUNK))
    b_enc_b = jnp.broadcast_to(b_enc.astype(jnp.float32)[:, None], (F, _CHUNK))

    # Fold the global-average-pool 1/HW into the classifier weight (x @ W^T).
    w_cls_t = jnp.transpose(w_cls, (1, 0)).astype(jnp.float32) / float(HW)
    w_cls_p = jnp.zeros((F, nc_pad), jnp.float32).at[:, :NC].set(w_cls_t)
    b_cls_p = jnp.zeros((1, nc_pad), jnp.float32).at[0, :NC].set(
        b_cls.astype(jnp.float32))

    kernel = functools.partial(_classifier_kernel, hw_total=HW,
                               tile_hw=tile_hw, mask_tail=mask_tail)

    grid_spec = pltpu.PrefetchScalarGridSpec(
        num_scalar_prefetch=0,
        grid=(n_b, n_hw),
        in_specs=[
            pl.BlockSpec((1, tile_b, C, tile_hw), lambda i, k: (i, 0, 0, k)),
            pl.BlockSpec((C, F, _CHUNK),          lambda i, k: (0, 0, 0)),
            pl.BlockSpec((F, _CHUNK),             lambda i, k: (0, 0)),
            pl.BlockSpec((F, nc_pad),             lambda i, k: (0, 0)),
            pl.BlockSpec((1, nc_pad),             lambda i, k: (0, 0)),
        ],
        out_specs=pl.BlockSpec((1, tile_b, nc_pad), lambda i, k: (i, 0, 0)),
        scratch_shapes=[pltpu.VMEM((tile_b, F, _CHUNK), jnp.float32)],
    )

    out = pl.pallas_call(
        kernel,
        out_shape=jax.ShapeDtypeStruct((n_b, tile_b, nc_pad), jnp.float32),
        grid_spec=grid_spec,
        compiler_params=pltpu.CompilerParams(
            dimension_semantics=("parallel", "arbitrary")),
    )(x, w_enc_b, b_enc_b, w_cls_p, b_cls_p)

    return out.reshape(b_pad, nc_pad)[:B, :NC]


def _reference(x_nchw, w_enc, b_enc, w_cls, b_cls):
    """Pure-JAX reference of the same forward pass."""
    B, C, H, W = x_nchw.shape
    x = jnp.transpose(x_nchw, (0, 2, 3, 1)).reshape(B, H * W, C)
    h = jnp.maximum(jnp.einsum("bhc,cf->bhf", x, w_enc) + b_enc, 0.0)
    feat = jnp.mean(h, axis=1)                                  # (B, F)
    return feat @ w_cls.T + b_cls                               # (B, NC)


if __name__ == "__main__":
    # Small shapes consistent with the module's forward.
    B, C, H, W = 2, 4, 16, 16
    feature_dim = 32
    num_cls = 10

    key = jax.random.PRNGKey(0)
    k_x, k_we, k_be, k_wc, k_bc = jax.random.split(key, 5)

    x = jax.random.normal(k_x, (B, C, H, W), dtype=jnp.float32)

    # Deterministic "pretrained" parameters (synthetic, not a checkpoint).
    w_enc = jax.random.normal(k_we, (C, feature_dim), dtype=jnp.float32) * 0.1
    b_enc = jax.random.normal(k_be, (feature_dim,), dtype=jnp.float32) * 0.1
    w_cls = jax.random.normal(k_wc, (num_cls, feature_dim), dtype=jnp.float32) * 0.1
    b_cls = jax.random.normal(k_bc, (num_cls,), dtype=jnp.float32) * 0.1

    pred = pretrained_image_classifier(x, w_enc, b_enc, w_cls, b_cls)
    pred = jax.block_until_ready(pred)

    ref = _reference(x, w_enc, b_enc, w_cls, b_cls)
    assert pred.shape == (B, num_cls)
    assert jnp.allclose(pred, ref, atol=1e-4, rtol=1e-4), "mismatch vs reference"

    print("KERNEL_OK")
</pallas_src>

<mosaic_0001>
module attributes {stable_mosaic.version = 11 : i64} {
  func.func @_classifier_kernel(%arg0: i32, %arg1: i32, %arg2: memref<1x1x4x256xf32, #tpu.memory_space<vmem>>, %arg3: memref<4x32x128xf32, #tpu.memory_space<vmem>>, %arg4: memref<32x128xf32, #tpu.memory_space<vmem>>, %arg5: memref<32x128xf32, #tpu.memory_space<vmem>>, %arg6: memref<1x128xf32, #tpu.memory_space<vmem>>, %arg7: memref<1x1x128xf32, #tpu.memory_space<vmem>>, %arg8: memref<1x32x128xf32, #tpu.memory_space<vmem>>) attributes {dimension_semantics = [#tpu.dimension_semantics<parallel>, #tpu.dimension_semantics<arbitrary>], iteration_bounds = array<i64: 2, 1>, scalar_prefetch = 0 : i64, scratch_operands = 1 : i64, tpu.core_type = #tpu.core_type<tc>, window_params = [{transform_indices = @transform_0, window_bounds = array<i64: 1, 1, 4, 256>}, {pipeline_mode = #tpu.pipeline_mode<synchronous>, transform_indices = @transform_1, window_bounds = array<i64: 4, 32, 128>}, {pipeline_mode = #tpu.pipeline_mode<synchronous>, transform_indices = @transform_2, window_bounds = array<i64: 32, 128>}, {pipeline_mode = #tpu.pipeline_mode<synchronous>, transform_indices = @transform_3, window_bounds = array<i64: 32, 128>}, {pipeline_mode = #tpu.pipeline_mode<synchronous>, transform_indices = @transform_4, window_bounds = array<i64: 1, 128>}, {transform_indices = @transform_5, window_bounds = array<i64: 1, 1, 128>}]} {
    %c0_i32 = arith.constant 0 : i32
    %0 = arith.cmpi eq, %arg1, %c0_i32 : i32
    %1 = arith.extui %0 : i1 to i32
    %c0_i32_0 = arith.constant 0 : i32
    %2 = arith.cmpi ne, %1, %c0_i32_0 : i32
    scf.if %2 {
      %cst_48 = arith.constant 0.000000e+00 : f32
      %86 = vector.broadcast %cst_48 : f32 to vector<1x32x128xf32>
      %c0_49 = arith.constant 0 : index
      %c0_50 = arith.constant 0 : index
      %c0_51 = arith.constant 0 : index
      %87 = vector.load %arg8[%c0_49, %c0_50, %c0_51] : memref<1x32x128xf32, #tpu.memory_space<vmem>>, vector<1x32x128xf32>
      tpu.vector_store %arg8[%c0_49, %c0_50, %c0_51], %86 {strides = array<i32>} : memref<1x32x128xf32, #tpu.memory_space<vmem>>, vector<1x32x128xf32>,
    } else {
    }
    %c0_i32_1 = arith.constant 0 : i32
    %c128_i32 = arith.constant 128 : i32
    %3 = arith.muli %c0_i32_1, %c128_i32 : i32
    %4 = tpu.assume_multiple %3, 128 : i32
    %c0 = arith.constant 0 : index
    %c0_2 = arith.constant 0 : index
    %c0_3 = arith.constant 0 : index
    %5 = arith.index_cast %4 : i32 to index
    %6 = vector.load %arg2[%c0, %c0_2, %c0_3, %5] : memref<1x1x4x256xf32, #tpu.memory_space<vmem>>, vector<1x1x4x128xf32>
    %7 = vector.shape_cast %6 : vector<1x1x4x128xf32> to vector<1x4x128xf32>
    %c0_4 = arith.constant 0 : index
    %c0_5 = arith.constant 0 : index
    %c0_6 = arith.constant 0 : index
    %8 = vector.load %arg3[%c0_4, %c0_5, %c0_6] : memref<4x32x128xf32, #tpu.memory_space<vmem>>, vector<1x32x128xf32>
    %9 = vector.shape_cast %8 : vector<1x32x128xf32> to vector<32x128xf32>
    %10 = vector.shape_cast %9 : vector<32x128xf32> to vector<1x32x128xf32>
    %11 = vector.extract_strided_slice %7 {offsets = [0, 0, 0], sizes = [1, 1, 128], strides = [1, 1, 1]} : vector<1x4x128xf32> to vector<1x1x128xf32>
    %12 = vector.broadcast %11 : vector<1x1x128xf32> to vector<1x32x128xf32>
    %13 = arith.mulf %10, %12 : vector<1x32x128xf32>
    %c1 = arith.constant 1 : index
    %c0_7 = arith.constant 0 : index
    %c0_8 = arith.constant 0 : index
    %14 = vector.load %arg3[%c1, %c0_7, %c0_8] : memref<4x32x128xf32, #tpu.memory_space<vmem>>, vector<1x32x128xf32>
    %15 = vector.shape_cast %14 : vector<1x32x128xf32> to vector<32x128xf32>
    %16 = vector.shape_cast %15 : vector<32x128xf32> to vector<1x32x128xf32>
    %17 = vector.extract_strided_slice %7 {offsets = [0, 1, 0], sizes = [1, 1, 128], strides = [1, 1, 1]} : vector<1x4x128xf32> to vector<1x1x128xf32>
    %18 = vector.broadcast %17 : vector<1x1x128xf32> to vector<1x32x128xf32>
    %19 = arith.mulf %16, %18 : vector<1x32x128xf32>
    %20 = arith.addf %13, %19 : vector<1x32x128xf32>
    %c2 = arith.constant 2 : index
    %c0_9 = arith.constant 0 : index
    %c0_10 = arith.constant 0 : index
    %21 = vector.load %arg3[%c2, %c0_9, %c0_10] : memref<4x32x128xf32, #tpu.memory_space<vmem>>, vector<1x32x128xf32>
    %22 = vector.shape_cast %21 : vector<1x32x128xf32> to vector<32x128xf32>
    %23 = vector.shape_cast %22 : vector<32x128xf32> to vector<1x32x128xf32>
    %24 = vector.extract_strided_slice %7 {offsets = [0, 2, 0], sizes = [1, 1, 128], strides = [1, 1, 1]} : vector<1x4x128xf32> to vector<1x1x128xf32>
    %25 = vector.broadcast %24 : vector<1x1x128xf32> to vector<1x32x128xf32>
    %26 = arith.mulf %23, %25 : vector<1x32x128xf32>
    %27 = arith.addf %20, %26 : vector<1x32x128xf32>
    %c3 = arith.constant 3 : index
    %c0_11 = arith.constant 0 : index
    %c0_12 = arith.constant 0 : index
    %28 = vector.load %arg3[%c3, %c0_11, %c0_12] : memref<4x32x128xf32, #tpu.memory_space<vmem>>, vector<1x32x128xf32>
    %29 = vector.shape_cast %28 : vector<1x32x128xf32> to vector<32x128xf32>
    %30 = vector.shape_cast %29 : vector<32x128xf32> to vector<1x32x128xf32>
    %31 = vector.extract_strided_slice %7 {offsets = [0, 3, 0], sizes = [1, 1, 128], strides = [1, 1, 1]} : vector<1x4x128xf32> to vector<1x1x128xf32>
    %32 = vector.broadcast %31 : vector<1x1x128xf32> to vector<1x32x128xf32>
    %33 = arith.mulf %30, %32 : vector<1x32x128xf32>
    %34 = arith.addf %27, %33 : vector<1x32x128xf32>
    %c0_13 = arith.constant 0 : index
    %c0_14 = arith.constant 0 : index
    %35 = vector.load %arg4[%c0_13, %c0_14] : memref<32x128xf32, #tpu.memory_space<vmem>>, vector<32x128xf32>
    %36 = vector.shape_cast %35 : vector<32x128xf32> to vector<1x32x128xf32>
    %37 = arith.addf %34, %36 : vector<1x32x128xf32>
    %cst = arith.constant 0.000000e+00 : f32
    %38 = vector.broadcast %cst : f32 to vector<1x32x128xf32>
    %39 = arith.maximumf %37, %38 : vector<1x32x128xf32>
    %c0_15 = arith.constant 0 : index
    %c0_16 = arith.constant 0 : index
    %c0_17 = arith.constant 0 : index
    %40 = vector.load %arg8[%c0_15, %c0_16, %c0_17] : memref<1x32x128xf32, #tpu.memory_space<vmem>>, vector<1x32x128xf32>
    %41 = arith.addf %40, %39 : vector<1x32x128xf32>
    %c0_18 = arith.constant 0 : index
    %c0_19 = arith.constant 0 : index
    %c0_20 = arith.constant 0 : index
    %42 = vector.load %arg8[%c0_18, %c0_19, %c0_20] : memref<1x32x128xf32, #tpu.memory_space<vmem>>, vector<1x32x128xf32>
    tpu.vector_store %arg8[%c0_18, %c0_19, %c0_20], %41 {strides = array<i32>} : memref<1x32x128xf32, #tpu.memory_space<vmem>>, vector<1x32x128xf32>,
    %c1_i32 = arith.constant 1 : i32
    %c128_i32_21 = arith.constant 128 : i32
    %43 = arith.muli %c1_i32, %c128_i32_21 : i32
    %44 = tpu.assume_multiple %43, 128 : i32
    %c0_22 = arith.constant 0 : index
    %c0_23 = arith.constant 0 : index
    %c0_24 = arith.constant 0 : index
    %45 = arith.index_cast %44 : i32 to index
    %46 = vector.load %arg2[%c0_22, %c0_23, %c0_24, %45] : memref<1x1x4x256xf32, #tpu.memory_space<vmem>>, vector<1x1x4x128xf32>
    %47 = vector.shape_cast %46 : vector<1x1x4x128xf32> to vector<1x4x128xf32>
    %c0_25 = arith.constant 0 : index
    %c0_26 = arith.constant 0 : index
    %c0_27 = arith.constant 0 : index
    %48 = vector.load %arg3[%c0_25, %c0_26, %c0_27] : memref<4x32x128xf32, #tpu.memory_space<vmem>>, vector<1x32x128xf32>
    %49 = vector.shape_cast %48 : vector<1x32x128xf32> to vector<32x128xf32>
    %50 = vector.shape_cast %49 : vector<32x128xf32> to vector<1x32x128xf32>
    %51 = vector.extract_strided_slice %47 {offsets = [0, 0, 0], sizes = [1, 1, 128], strides = [1, 1, 1]} : vector<1x4x128xf32> to vector<1x1x128xf32>
    %52 = vector.broadcast %51 : vector<1x1x128xf32> to vector<1x32x128xf32>
    %53 = arith.mulf %50, %52 : vector<1x32x128xf32>
    %c1_28 = arith.constant 1 : index
    %c0_29 = arith.constant 0 : index
    %c0_30 = arith.constant 0 : index
    %54 = vector.load %arg3[%c1_28, %c0_29, %c0_30] : memref<4x32x128xf32, #tpu.memory_space<vmem>>, vector<1x32x128xf32>
    %55 = vector.shape_cast %54 : vector<1x32x128xf32> to vector<32x128xf32>
    %56 = vector.shape_cast %55 : vector<32x128xf32> to vector<1x32x128xf32>
    %57 = vector.extract_strided_slice %47 {offsets = [0, 1, 0], sizes = [1, 1, 128], strides = [1, 1, 1]} : vector<1x4x128xf32> to vector<1x1x128xf32>
    %58 = vector.broadcast %57 : vector<1x1x128xf32> to vector<1x32x128xf32>
    %59 = arith.mulf %56, %58 : vector<1x32x128xf32>
    %60 = arith.addf %53, %59 : vector<1x32x128xf32>
    %c2_31 = arith.constant 2 : index
    %c0_32 = arith.constant 0 : index
    %c0_33 = arith.constant 0 : index
    %61 = vector.load %arg3[%c2_31, %c0_32, %c0_33] : memref<4x32x128xf32, #tpu.memory_space<vmem>>, vector<1x32x128xf32>
    %62 = vector.shape_cast %61 : vector<1x32x128xf32> to vector<32x128xf32>
    %63 = vector.shape_cast %62 : vector<32x128xf32> to vector<1x32x128xf32>
    %64 = vector.extract_strided_slice %47 {offsets = [0, 2, 0], sizes = [1, 1, 128], strides = [1, 1, 1]} : vector<1x4x128xf32> to vector<1x1x128xf32>
    %65 = vector.broadcast %64 : vector<1x1x128xf32> to vector<1x32x128xf32>
    %66 = arith.mulf %63, %65 : vector<1x32x128xf32>
    %67 = arith.addf %60, %66 : vector<1x32x128xf32>
    %c3_34 = arith.constant 3 : index
    %c0_35 = arith.constant 0 : index
    %c0_36 = arith.constant 0 : index
    %68 = vector.load %arg3[%c3_34, %c0_35, %c0_36] : memref<4x32x128xf32, #tpu.memory_space<vmem>>, vector<1x32x128xf32>
    %69 = vector.shape_cast %68 : vector<1x32x128xf32> to vector<32x128xf32>
    %70 = vector.shape_cast %69 : vector<32x128xf32> to vector<1x32x128xf32>
    %71 = vector.extract_strided_slice %47 {offsets = [0, 3, 0], sizes = [1, 1, 128], strides = [1, 1, 1]} : vector<1x4x128xf32> to vector<1x1x128xf32>
    %72 = vector.broadcast %71 : vector<1x1x128xf32> to vector<1x32x128xf32>
    %73 = arith.mulf %70, %72 : vector<1x32x128xf32>
    %74 = arith.addf %67, %73 : vector<1x32x128xf32>
    %c0_37 = arith.constant 0 : index
    %c0_38 = arith.constant 0 : index
    %75 = vector.load %arg4[%c0_37, %c0_38] : memref<32x128xf32, #tpu.memory_space<vmem>>, vector<32x128xf32>
    %76 = vector.shape_cast %75 : vector<32x128xf32> to vector<1x32x128xf32>
    %77 = arith.addf %74, %76 : vector<1x32x128xf32>
    %cst_39 = arith.constant 0.000000e+00 : f32
    %78 = vector.broadcast %cst_39 : f32 to vector<1x32x128xf32>
    %79 = arith.maximumf %77, %78 : vector<1x32x128xf32>
    %c0_40 = arith.constant 0 : index
    %c0_41 = arith.constant 0 : index
    %c0_42 = arith.constant 0 : index
    %80 = vector.load %arg8[%c0_40, %c0_41, %c0_42] : memref<1x32x128xf32, #tpu.memory_space<vmem>>, vector<1x32x128xf32>
    %81 = arith.addf %80, %79 : vector<1x32x128xf32>
    %c0_43 = arith.constant 0 : index
    %c0_44 = arith.constant 0 : index
    %c0_45 = arith.constant 0 : index
    %82 = vector.load %arg8[%c0_43, %c0_44, %c0_45] : memref<1x32x128xf32, #tpu.memory_space<vmem>>, vector<1x32x128xf32>
    tpu.vector_store %arg8[%c0_43, %c0_44, %c0_45], %81 {strides = array<i32>} : memref<1x32x128xf32, #tpu.memory_space<vmem>>, vector<1x32x128xf32>,
    %c2_i32 = arith.constant 2 : i32
    %c0_i32_46 = arith.constant 0 : i32
    %83 = arith.cmpi eq, %arg1, %c0_i32_46 : i32
    %84 = arith.extui %83 : i1 to i32
    %c0_i32_47 = arith.constant 0 : i32
    %85 = arith.cmpi ne, %84, %c0_i32_47 : i32
    scf.if %85 {
      %c0_48 = arith.constant 0 : index
      %c0_49 = arith.constant 0 : index
      %c0_50 = arith.constant 0 : index
      %86 = vector.load %arg8[%c0_48, %c0_49, %c0_50] : memref<1x32x128xf32, #tpu.memory_space<vmem>>, vector<1x32x128xf32>
      %cst_51 = arith.constant dense<0.000000e+00> : vector<1x32xf32>
      %87 = vector.multi_reduction <add>, %86, %cst_51 [2] : vector<1x32x128xf32> to vector<1x32xf32>
      %c0_52 = arith.constant 0 : index
      %c0_53 = arith.constant 0 : index
      %88 = vector.load %arg5[%c0_52, %c0_53] : memref<32x128xf32, #tpu.memory_space<vmem>>, vector<32x128xf32>
      %cst_54 = arith.constant dense<0.000000e+00> : vector<1x128xf32>
      %89 = tpu.matmul %87, %88, %cst_54 {dimension_numbers = #tpu.dot_dimension_numbers<[1], [0], [0], [1], [0, 0, 1, 1], [], []>} : vector<1x32xf32>, vector<32x128xf32>, vector<1x128xf32> -> vector<1x128xf32>
      %c0_55 = arith.constant 0 : index
      %c0_56 = arith.constant 0 : index
      %90 = vector.load %arg6[%c0_55, %c0_56] : memref<1x128xf32, #tpu.memory_space<vmem>>, vector<1x128xf32>
      %91 = arith.addf %89, %90 : vector<1x128xf32>
      %c0_57 = arith.constant 0 : index
      %c0_58 = arith.constant 0 : index
      %c0_59 = arith.constant 0 : index
      %92 = vector.load %arg7[%c0_57, %c0_58, %c0_59] : memref<1x1x128xf32, #tpu.memory_space<vmem>>, vector<1x1x128xf32>
      %93 = vector.shape_cast %92 : vector<1x1x128xf32> to vector<1x128xf32>
      %94 = vector.shape_cast %91 : vector<1x128xf32> to vector<1x1x128xf32>
      tpu.vector_store %arg7[%c0_57, %c0_58, %c0_59], %94 {strides = array<i32>} : memref<1x1x128xf32, #tpu.memory_space<vmem>>, vector<1x1x128xf32>,
    } else {
    }
    return
  }
  func.func @transform_0(%arg0: i32, %arg1: i32) -> (i32, i32, i32, i32) {
    %c0_i32 = arith.constant 0 : i32
    %c0_i32_0 = arith.constant 0 : i32
    %c0_i32_1 = arith.constant 0 : i32
    return %arg0, %c0_i32, %c0_i32_0, %arg1 : i32, i32, i32, i32
  }
  func.func @transform_1(%arg0: i32, %arg1: i32) -> (i32, i32, i32) {
    %c0_i32 = arith.constant 0 : i32
    %c0_i32_0 = arith.constant 0 : i32
    %c0_i32_1 = arith.constant 0 : i32
    %c0_i32_2 = arith.constant 0 : i32
    return %c0_i32, %c0_i32_0, %c0_i32_1 : i32, i32, i32
  }
  func.func @transform_2(%arg0: i32, %arg1: i32) -> (i32, i32) {
    %c0_i32 = arith.constant 0 : i32
    %c0_i32_0 = arith.constant 0 : i32
    %c0_i32_1 = arith.constant 0 : i32
    return %c0_i32, %c0_i32_0 : i32, i32
  }
  func.func @transform_3(%arg0: i32, %arg1: i32) -> (i32, i32) {
    %c0_i32 = arith.constant 0 : i32
    %c0_i32_0 = arith.constant 0 : i32
    %c0_i32_1 = arith.constant 0 : i32
    return %c0_i32, %c0_i32_0 : i32, i32
  }
  func.func @transform_4(%arg0: i32, %arg1: i32) -> (i32, i32) {
    %c0_i32 = arith.constant 0 : i32
    %c0_i32_0 = arith.constant 0 : i32
    %c0_i32_1 = arith.constant 0 : i32
    return %c0_i32, %c0_i32_0 : i32, i32
  }
  func.func @transform_5(%arg0: i32, %arg1: i32) -> (i32, i32, i32) {
    %c0_i32 = arith.constant 0 : i32
    %c0_i32_0 = arith.constant 0 : i32
    %c0_i32_1 = arith.constant 0 : i32
    return %arg0, %c0_i32, %c0_i32_0 : i32, i32, i32
  }
}

</mosaic_0001>

<llo_original>
// kernel: tpu_custom_call.1
$region0: #{tpu_custom_call.1}
  #allocation0 [shape = 'u32[]', space=smem, size = 0x4, offset = 0x4, fixed_abs, tag = 'smem constant byte address 0x4 - core index']
  #allocation1 [shape = 'u32[144,128]{1,0:T(1,128)}', space=vmem, size = 0x12000, scoped, tag = 'internal scratch']
  #allocation2 [shape = 'f32[1,32,128]{2,1,0:T(8,128)}', space=vmem, size = 0x4000, scoped, tag = 'scratch operand']
  %s0 = inlined_call_operand.hbm [shape: f32[2,1,4,256], index: 0, kind: input, shape index: {}]
  %s1 = inlined_call_operand.hbm [shape: f32[4,32,128], index: 1, kind: input, shape index: {}]
  %s2 = inlined_call_operand.hbm [shape: f32[32,128], index: 2, kind: input, shape index: {}]
  %s3 = inlined_call_operand.hbm [shape: f32[32,128], index: 3, kind: input, shape index: {}]
  %s4 = inlined_call_operand.vmem [shape: f32[1,128], index: 4, kind: input, shape index: {}]
  %s5 = inlined_call_operand.hbm [shape: f32[2,1,128], index: 5, kind: output, shape index: {}]
  %s6 = sld [smem:[#allocation0]]
  $region77: #{tpu_custom_call.1} parent=0
    _
  %s8 = ssub.s32 1, %s6
  %s9 = scalar_select 0, %s8, %s6
  $region1: #{tpu_custom_call.1} parent=0
    #allocation3 [shape = 'u8[8192]{0}', space=vmem, size = 0x2000, scoped, tag = 'input window, operand 0']
    #allocation4 [shape = 's32[2]{0}', space=sflag, size = 0x8, scoped, tag = 'scoped memory for tpu_custom_call.1']
    #allocation5 [shape = 's32[2]{0}', space=sflag, size = 0x8, scoped, tag = 'scoped memory for tpu_custom_call.1']
    #allocation6 [shape = 'u8[65536]{0}', space=vmem, size = 0x10000, scoped, tag = 'input window, operand 1, single buffered']
    #allocation7 [shape = 's32[1]{0}', space=sflag, size = 0x4, scoped, tag = 'scoped memory for tpu_custom_call.1']
    #allocation8 [shape = 'u8[16384]{0}', space=vmem, size = 0x4000, scoped, tag = 'input window, operand 2, single buffered']
    #allocation9 [shape = 'u8[16384]{0}', space=vmem, size = 0x4000, scoped, tag = 'input window, operand 3, single buffered']
    #allocation10 [shape = 's32[1]{0}', space=sflag, size = 0x4, scoped, tag = 'scoped memory for tpu_custom_call.1']
    #allocation11 [shape = 'u8[1024]{0}', space=vmem, size = 0x400, scoped, tag = 'output window, operand 0']
    %10 = vsyncpa [#allocation4], 0
    %s11 = scalar_lea.sflag [#allocation4], 1
    %12 = vsyncpa %s11, 0
    %13 = vsyncpa [#allocation7], 0
    %14 = vsyncpa [#allocation10], 0
    %15 = vsyncpa [#allocation5], 0
    %s16 = scalar_lea.sflag [#allocation5], 1
    %17 = vsyncpa %s16, 0
    loop: start=0, step=1, limit=4
    $region2: #{tpu_custom_call.1} parent=1 // loop_pre_header
      _
    $region3: #{tpu_custom_call.1} parent=1 // loop_header
      %s19 = sphi 0, %s23
      %p20 = scmp.ge.s32.totalorder %s19, 4
      %s26 = sphi 0, %s38
      %s27 = sphi 0, %s34
      %s28 = sphi 0, %s26
      %s29 = sphi 0, %s27
      %s30 = sphi 0, %s28
      %s31 = sphi 0, %s29
      %s43 = sphi 0, %s45
      %s46 = sphi 0, %s43
      %s47 = sphi 0, %s46
      %s63 = sphi 0, %s47
      %s67 = sphi 0, %s67
      %s69 = sphi 0, %s67
      %s70 = sphi 0, %s69
      %s84 = sphi 0, %s70
      %s88 = sphi 0, %s88
      %s90 = sphi 0, %s88
      %s91 = sphi 0, %s90
      %s105 = sphi 0, %s91
      %s109 = sphi 0, %s109
      %s111 = sphi 0, %s109
      %s112 = sphi 0, %s111
      %s126 = sphi 0, %s112
      %s130 = sphi 0, %s130
      %s132 = sphi 0, %s130
      %s133 = sphi 0, %s132
      %s147 = sphi 0, %s133
      %s153 = sphi 0, %s155
      %s156 = sphi 0, %s153
      %s157 = sphi 0, %s156
      %s173 = sphi 0, %s157
    $region4: #{tpu_custom_call.1} parent=1 // loop_header_branch
      %22 = sbr.rel (%p20) target = $region8
    $region5: #{tpu_custom_call.1} parent=1 // loop_body
      %s24 = ssub.s32 %s19, 1
      %s25 = ssub.s32 %s19, 2
      %s32 = sadd.s32 1, %s27
      %p33 = scmp.ge.s32.totalorder %s32, 1
      %s34 = scalar_select %p33, 0, %s32
      %s35 = sadd.s32 1, %s26
      %s36 = scalar_select %p33, %s35, %s26
      %p37 = scmp.ge.s32.totalorder %s36, 2
      %s38 = scalar_select %p37, 0, %s36
      %s39 = ssub.s32 %s26, %s38
      %s40 = ssub.s32 %s27, %s34
      %s41 = sor.u32 %s39, %s40
      %p42 = scmp.eq.s32.totalorder %s41, 0
      %s44 = sadd.s32 %s43, 1
      %s45 = scalar_select %p42, %s43, %s44
      %p48 = pneg %p42
      %p49 = scmp.eq.s32.totalorder %s19, 1
      %p50 = por %p48, %p49
      %p51 = scmp.ne.s32.totalorder %s43, %s46
      %p52 = scmp.eq.s32.totalorder %s19, 0
      %p53 = por %p51, %p52
      %p54 = scmp.ne.s32.totalorder %s43, %s46
      %p55 = scmp.eq.s32.totalorder %s24, 1
      %p56 = por %p54, %p55
      %p57 = scmp.ne.s32.totalorder %s46, %s47
      %p58 = scmp.eq.s32.totalorder %s24, 0
      %p59 = por %p57, %p58
      %p60 = scmp.ne.s32.totalorder %s46, %s47
      %p61 = scmp.eq.s32.totalorder %s25, 1
      %p62 = por %p60, %p61
      %p64 = scmp.ne.s32.totalorder %s47, %s63
      %p65 = scmp.eq.s32.totalorder %s25, 0
      %p66 = por %p64, %p65
      %s68 = sadd.s32 %s67, 1
      %p71 = scmp.eq.s32.totalorder %s19, 1
      %p72 = scmp.ne.s32.totalorder %s67, %s69
      %p73 = scmp.eq.s32.totalorder %s19, 0
      %p74 = por %p72, %p73
      %p75 = scmp.ne.s32.totalorder %s67, %s69
      %p76 = scmp.eq.s32.totalorder %s24, 1
      %p77 = por %p75, %p76
      %p78 = scmp.ne.s32.totalorder %s69, %s70
      %p79 = scmp.eq.s32.totalorder %s24, 0
      %p80 = por %p78, %p79
      %p81 = scmp.ne.s32.totalorder %s69, %s70
      %p82 = scmp.eq.s32.totalorder %s25, 1
      %p83 = por %p81, %p82
      %p85 = scmp.ne.s32.totalorder %s70, %s84
      %p86 = scmp.eq.s32.totalorder %s25, 0
      %p87 = por %p85, %p86
      %s89 = sadd.s32 %s88, 1
      %p92 = scmp.eq.s32.totalorder %s19, 1
      %p93 = scmp.ne.s32.totalorder %s88, %s90
      %p94 = scmp.eq.s32.totalorder %s19, 0
      %p95 = por %p93, %p94
      %p96 = scmp.ne.s32.totalorder %s88, %s90
      %p97 = scmp.eq.s32.totalorder %s24, 1
      %p98 = por %p96, %p97
      %p99 = scmp.ne.s32.totalorder %s90, %s91
      %p100 = scmp.eq.s32.totalorder %s24, 0
      %p101 = por %p99, %p100
      %p102 = scmp.ne.s32.totalorder %s90, %s91
      %p103 = scmp.eq.s32.totalorder %s25, 1
      %p104 = por %p102, %p103
      %p106 = scmp.ne.s32.totalorder %s91, %s105
      %p107 = scmp.eq.s32.totalorder %s25, 0
      %p108 = por %p106, %p107
      %s110 = sadd.s32 %s109, 1
      %p113 = scmp.eq.s32.totalorder %s19, 1
      %p114 = scmp.ne.s32.totalorder %s109, %s111
      %p115 = scmp.eq.s32.totalorder %s19, 0
      %p116 = por %p114, %p115
      %p117 = scmp.ne.s32.totalorder %s109, %s111
      %p118 = scmp.eq.s32.totalorder %s24, 1
      %p119 = por %p117, %p118
      %p120 = scmp.ne.s32.totalorder %s111, %s112
      %p121 = scmp.eq.s32.totalorder %s24, 0
      %p122 = por %p120, %p121
      %p123 = scmp.ne.s32.totalorder %s111, %s112
      %p124 = scmp.eq.s32.totalorder %s25, 1
      %p125 = por %p123, %p124
      %p127 = scmp.ne.s32.totalorder %s112, %s126
      %p128 = scmp.eq.s32.totalorder %s25, 0
      %p129 = por %p127, %p128
      %s131 = sadd.s32 %s130, 1
      %p134 = scmp.eq.s32.totalorder %s19, 1
      %p135 = scmp.ne.s32.totalorder %s130, %s132
      %p136 = scmp.eq.s32.totalorder %s19, 0
      %p137 = por %p135, %p136
      %p138 = scmp.ne.s32.totalorder %s130, %s132
      %p139 = scmp.eq.s32.totalorder %s24, 1
      %p140 = por %p138, %p139
      %p141 = scmp.ne.s32.totalorder %s132, %s133
      %p142 = scmp.eq.s32.totalorder %s24, 0
      %p143 = por %p141, %p142
      %p144 = scmp.ne.s32.totalorder %s132, %s133
      %p145 = scmp.eq.s32.totalorder %s25, 1
      %p146 = por %p144, %p145
      %p148 = scmp.ne.s32.totalorder %s133, %s147
      %p149 = scmp.eq.s32.totalorder %s25, 0
      %p150 = por %p148, %p149
      %s151 = ssub.s32 %s26, %s38
      %p152 = scmp.eq.s32.totalorder %s151, 0
      %s154 = sadd.s32 %s153, 1
      %s155 = scalar_select %p152, %s153, %s154
      %p158 = pneg %p152
      %p159 = scmp.eq.s32.totalorder %s19, 1
      %p160 = por %p158, %p159
      %p161 = scmp.ne.s32.totalorder %s153, %s156
      %p162 = scmp.eq.s32.totalorder %s19, 0
      %p163 = por %p161, %p162
      %p164 = scmp.ne.s32.totalorder %s153, %s156
      %p165 = scmp.eq.s32.totalorder %s24, 1
      %p166 = por %p164, %p165
      %p167 = scmp.ne.s32.totalorder %s156, %s157
      %p168 = scmp.eq.s32.totalorder %s24, 0
      %p169 = por %p167, %p168
      %p170 = scmp.ne.s32.totalorder %s156, %s157
      %p171 = scmp.eq.s32.totalorder %s25, 1
      %p172 = por %p170, %p171
      %p174 = scmp.ne.s32.totalorder %s157, %s173
      %p175 = scmp.eq.s32.totalorder %s25, 0
      %p176 = por %p174, %p175
      %p177 = scmp.le.s32.totalorder 1, %s19
      %p178 = scmp.lt.s32.totalorder %s19, 3
      %p179 = pnand %p177, %p178
      %p180 = pneg %p179
      // Predicated region
      $region9: #{tpu_custom_call.1} parent=5 // pred_check
        _
      $region10: #{tpu_custom_call.1} parent=5 // pred_check_branch
        %182 = sbr.rel (%p179) target = $region12
      $region11: #{tpu_custom_call.1} parent=5 // pred_region
        %s183 = ssub.s32 %s19, 1
        // Predicated region
        $region13: #{tpu_custom_call.1} parent=11 // pred_check
          %p184 = pneg %p80
        $region14: #{tpu_custom_call.1} parent=11 // pred_check_branch
          %186 = sbr.rel (%p184) target = $region16
        $region15: #{tpu_custom_call.1} parent=11 // pred_region
          %s188 = ssub.s32 2048, 2048
          %189 = vsyncadd [#allocation7], %s188
          %s190 = sshll.u32 [#allocation6], 4
          %s191 = int_to_ptr.vmem [resolvable:$true] %s190
          %196 = dma.hbm_to_vmem [thread:$0]  %s1, 2048, %s191, [#allocation7], 128, 128, 8
        $region16: #{tpu_custom_call.1} parent=11 // pred_fallthru
          _
        // Predicated region
        $region17: #{tpu_custom_call.1} parent=11 // pred_check
          %p197 = pneg %p101
        $region18: #{tpu_custom_call.1} parent=11 // pred_check_branch
          %199 = sbr.rel (%p197) target = $region20
        $region19: #{tpu_custom_call.1} parent=11 // pred_region
          %s201 = ssub.s32 512, 512
          %202 = vsyncadd [#allocation7], %s201
          %s203 = sshll.u32 [#allocation8], 4
          %s204 = int_to_ptr.vmem [resolvable:$true] %s203
          %209 = dma.hbm_to_vmem [thread:$0]  %s2, 512, %s204, [#allocation7], 128, 128, 8
        $region20: #{tpu_custom_call.1} parent=11 // pred_fallthru
          _
        // Predicated region
        $region21: #{tpu_custom_call.1} parent=11 // pred_check
          %p210 = pneg %p122
        $region22: #{tpu_custom_call.1} parent=11 // pred_check_branch
          %212 = sbr.rel (%p210) target = $region24
        $region23: #{tpu_custom_call.1} parent=11 // pred_region
          %s214 = ssub.s32 512, 512
          %215 = vsyncadd [#allocation10], %s214
          %s216 = sshll.u32 [#allocation9], 4
          %s217 = int_to_ptr.vmem [resolvable:$true] %s216
          %222 = dma.hbm_to_vmem [thread:$0]  %s3, 512, %s217, [#allocation10], 128, 128, 8
        $region24: #{tpu_custom_call.1} parent=11 // pred_fallthru
          _
        // Predicated region
        $region25: #{tpu_custom_call.1} parent=11 // pred_check
          %p223 = pneg %p143
        $region26: #{tpu_custom_call.1} parent=11 // pred_check_branch
          %225 = sbr.rel (%p223) target = $region28
        $region27: #{tpu_custom_call.1} parent=11 // pred_region
          _
        $region28: #{tpu_custom_call.1} parent=11 // pred_fallthru
          _
      $region12: #{tpu_custom_call.1} parent=5 // pred_fallthru
        _
      %p226 = scmp.lt.s32.totalorder %s19, 2
      // Predicated region
      $region29: #{tpu_custom_call.1} parent=5 // pred_check
        %p227 = pneg %p226
      $region30: #{tpu_custom_call.1} parent=5 // pred_check_branch
        %229 = sbr.rel (%p227) target = $region32
      $region31: #{tpu_custom_call.1} parent=5 // pred_region
        // Predicated region
        $region33: #{tpu_custom_call.1} parent=31 // pred_check
          %p230 = pneg %p53
        $region34: #{tpu_custom_call.1} parent=31 // pred_check_branch
          %232 = sbr.rel (%p230) target = $region36
        $region35: #{tpu_custom_call.1} parent=31 // pred_region
          %s233 = sand.u32 %s43, 1
          %s234 = scalar_lea.sflag [#allocation4], %s233
          %s235 = sand.u32 %s43, 1
          %s236 = smul.addr %s235, 8
          %s237 = scalar_lea.vmem [#allocation3], %s236
          %s238 = smul.u32 2, %s27
          %s240 = ssub.s32 128, 128
          %241 = vsyncadd %s234, %s240
          %s242 = smul.addr %s26, 2
          %s243 = sadd.s32 %s238, %s242
          %s244 = smul.addr %s243, 64
          %s245 = scalar_lea.hbm %s0, %s244
          %s247 = sshll.u32 %s237, 4
          %s248 = int_to_ptr.vmem [resolvable:$true] %s247
          %250 = dma.hbm_to_vmem [thread:$0]  %s245, 128, %s248, %s234
        $region36: #{tpu_custom_call.1} parent=31 // pred_fallthru
          _
      $region32: #{tpu_custom_call.1} parent=5 // pred_fallthru
        _
      %p251 = scmp.le.s32.totalorder 1, %s19
      %p252 = scmp.lt.s32.totalorder %s19, 3
      %p253 = pnand %p251, %p252
      %p254 = pneg %p253
      // Predicated region
      $region37: #{tpu_custom_call.1} parent=5 // pred_check
        _
      $region38: #{tpu_custom_call.1} parent=5 // pred_check_branch
        %256 = sbr.rel (%p253) target = $region40
      $region39: #{tpu_custom_call.1} parent=5 // pred_region
        %s257 = ssub.s32 %s19, 1
        %s258 = sand.u32 %s46, 1
        %s259 = scalar_lea.sflag [#allocation4], %s258
        %s260 = sand.u32 %s46, 1
        %s261 = smul.addr %s260, 8
        %s262 = scalar_lea.vmem [#allocation3], %s261
        // Predicated region
        $region41: #{tpu_custom_call.1} parent=39 // pred_check
          %p263 = pneg %p59
        $region42: #{tpu_custom_call.1} parent=39 // pred_check_branch
          %265 = sbr.rel (%p263) target = $region44
        $region43: #{tpu_custom_call.1} parent=39 // pred_region
          %266 = dma.done %s259, 128
        $region44: #{tpu_custom_call.1} parent=39 // pred_fallthru
          _
        // Predicated region
        $region45: #{tpu_custom_call.1} parent=39 // pred_check
          %p267 = pneg %p80
        $region46: #{tpu_custom_call.1} parent=39 // pred_check_branch
          %269 = sbr.rel (%p267) target = $region48
        $region47: #{tpu_custom_call.1} parent=39 // pred_region
          %270 = dma.done [#allocation7], 2048
        $region48: #{tpu_custom_call.1} parent=39 // pred_fallthru
          _
        // Predicated region
        $region49: #{tpu_custom_call.1} parent=39 // pred_check
          %p271 = pneg %p101
        $region50: #{tpu_custom_call.1} parent=39 // pred_check_branch
          %273 = sbr.rel (%p271) target = $region52
        $region51: #{tpu_custom_call.1} parent=39 // pred_region
          %274 = dma.done [#allocation7], 512
        $region52: #{tpu_custom_call.1} parent=39 // pred_fallthru
          _
        // Predicated region
        $region53: #{tpu_custom_call.1} parent=39 // pred_check
          %p275 = pneg %p122
        $region54: #{tpu_custom_call.1} parent=39 // pred_check_branch
          %277 = sbr.rel (%p275) target = $region56
        $region55: #{tpu_custom_call.1} parent=39 // pred_region
          %278 = dma.done [#allocation10], 512
        $region56: #{tpu_custom_call.1} parent=39 // pred_fallthru
          _
        %s279 = sand.u32 %s46, 1
        %s280 = scalar_lea.sflag [#allocation4], %s279
        %s281 = sand.u32 %s46, 1
        %s282 = smul.addr %s281, 8
        %s283 = scalar_lea.vmem [#allocation3], %s282
        %p284 = pneg %p59
        %p285 = pneg %p56
        %p286 = pneg %p80
        %p287 = pneg %p77
        %p288 = pneg %p101
        %p289 = pneg %p98
        %p290 = pneg %p122
        %p291 = pneg %p119
        %p292 = pneg %p143
        %p293 = pneg %p140
        %p294 = pneg %p169
        %p295 = pneg %p166
        %s296 = sand.u32 %s156, 1
        %s297 = scalar_lea.sflag [#allocation5], %s296
        %s298 = sand.u32 %s156, 1
        %s299 = scalar_lea.vmem [#allocation11], %s298
        %s300 = smul.u32 2, %s29
        %p301 = scmp.eq.s32.totalorder %s29, 0
        // Predicated region
        $region57: #{tpu_custom_call.1} parent=39 // pred_check
          %p302 = pneg %p301
        $region58: #{tpu_custom_call.1} parent=39 // pred_check_branch
          %304 = sbr.rel (%p302) target = $region60
        $region59: #{tpu_custom_call.1} parent=39 // pred_region
          %305 = vst [vmem:[#allocation2] sm:$0xff] 0.0
          %306 = vst [vmem:[#allocation2 + $0x8] sm:$0xff] 0.0
          %307 = vst [vmem:[#allocation2 + $0x10] sm:$0xff] 0.0
          %308 = vst [vmem:[#allocation2 + $0x18] sm:$0xff] 0.0
        $region60: #{tpu_custom_call.1} parent=39 // pred_fallthru
          _
        %v309 = vld [vmem:[%s262] sm:$0xf]
        %v310 = vld [vmem:[#allocation6] sm:$0xff]
        %v311 = vld [vmem:[#allocation6 + $0x8] sm:$0xff]
        %v312 = vld [vmem:[#allocation6 + $0x10] sm:$0xff]
        %v313 = vld [vmem:[#allocation6 + $0x18] sm:$0xff]
        %v314 = vlaneseq
        %v315 = vshrl.u32 %v314, 7
        %v316 = vsub.s32 0, %v315
        %v317 = vrot.slane %v309, %v316
        %v318 = vmul.f32 %v310, %v317
        %v319 = vmul.f32 %v311, %v317
        %v320 = vmul.f32 %v312, %v317
        %v321 = vmul.f32 %v313, %v317
        %s322 = scalar_lea.vmem [#allocation6], 32
        %v323 = vld [vmem:[%s322] sm:$0xff]
        %v324 = vld [vmem:[%s322 + $0x8] sm:$0xff]
        %v325 = vld [vmem:[%s322 + $0x10] sm:$0xff]
        %v326 = vld [vmem:[%s322 + $0x18] sm:$0xff]
        %v327 = vlaneseq
        %v328 = vshrl.u32 %v327, 7
        %v329 = vsub.s32 1, %v328
        %v330 = vrot.slane %v309, %v329
        %v331 = vmul.f32 %v323, %v330
        %v332 = vmul.f32 %v324, %v330
        %v333 = vmul.f32 %v325, %v330
        %v334 = vmul.f32 %v326, %v330
        %v335 = vadd.f32 %v318, %v331
        %v336 = vadd.f32 %v319, %v332
        %v337 = vadd.f32 %v320, %v333
        %v338 = vadd.f32 %v321, %v334
        %s339 = scalar_lea.vmem [#allocation6], 64
        %v340 = vld [vmem:[%s339] sm:$0xff]
        %v341 = vld [vmem:[%s339 + $0x8] sm:$0xff]
        %v342 = vld [vmem:[%s339 + $0x10] sm:$0xff]
        %v343 = vld [vmem:[%s339 + $0x18] sm:$0xff]
        %v344 = vlaneseq
        %v345 = vshrl.u32 %v344, 7
        %v346 = vsub.s32 2, %v345
        %v347 = vrot.slane %v309, %v346
        %v348 = vmul.f32 %v340, %v347
        %v349 = vmul.f32 %v341, %v347
        %v350 = vmul.f32 %v342, %v347
        %v351 = vmul.f32 %v343, %v347
        %v352 = vadd.f32 %v335, %v348
        %v353 = vadd.f32 %v336, %v349
        %v354 = vadd.f32 %v337, %v350
        %v355 = vadd.f32 %v338, %v351
        %s356 = scalar_lea.vmem [#allocation6], 96
        %v357 = vld [vmem:[%s356] sm:$0xff]
        %v358 = vld [vmem:[%s356 + $0x8] sm:$0xff]
        %v359 = vld [vmem:[%s356 + $0x10] sm:$0xff]
        %v360 = vld [vmem:[%s356 + $0x18] sm:$0xff]
        %v361 = vlaneseq
        %v362 = vshrl.u32 %v361, 7
        %v363 = vsub.s32 3, %v362
        %v364 = vrot.slane %v309, %v363
        %v365 = vmul.f32 %v357, %v364
        %v366 = vmul.f32 %v358, %v364
        %v367 = vmul.f32 %v359, %v364
        %v368 = vmul.f32 %v360, %v364
        %v369 = vadd.f32 %v352, %v365
        %v370 = vadd.f32 %v353, %v366
        %v371 = vadd.f32 %v354, %v367
        %v372 = vadd.f32 %v355, %v368
        %v373 = vld [vmem:[#allocation8] sm:$0xff]
        %v374 = vld [vmem:[#allocation8 + $0x8] sm:$0xff]
        %v375 = vld [vmem:[#allocation8 + $0x10] sm:$0xff]
        %v376 = vld [vmem:[#allocation8 + $0x18] sm:$0xff]
        %v377 = vadd.f32 %v369, %v373
        %v378 = vadd.f32 %v370, %v374
        %v379 = vadd.f32 %v371, %v375
        %v380 = vadd.f32 %v372, %v376
        %v381 = vmax.f32 %v377, 0.0
        %v382 = vmax.f32 %v378, 0.0
        %v383 = vmax.f32 %v379, 0.0
        %v384 = vmax.f32 %v380, 0.0
        %v385 = vld [vmem:[#allocation2] sm:$0xff]
        %v386 = vld [vmem:[#allocation2 + $0x8] sm:$0xff]
        %v387 = vld [vmem:[#allocation2 + $0x10] sm:$0xff]
        %v388 = vld [vmem:[#allocation2 + $0x18] sm:$0xff]
        %v389 = vadd.f32 %v385, %v381
        %v390 = vadd.f32 %v386, %v382
        %v391 = vadd.f32 %v387, %v383
        %v392 = vadd.f32 %v388, %v384
        %393 = vst [vmem:[#allocation2] sm:$0xff] %v389
        %394 = vst [vmem:[#allocation2 + $0x8] sm:$0xff] %v390
        %395 = vst [vmem:[#allocation2 + $0x10] sm:$0xff] %v391
        %396 = vst [vmem:[#allocation2 + $0x18] sm:$0xff] %v392
        %s397 = scalar_lea.vmem %s262, 4 [#allocation3]
        %v398 = vld [vmem:[%s397] sm:$0xf]
        %v399 = vld [vmem:[#allocation6] sm:$0xff]
        %v400 = vld [vmem:[#allocation6 + $0x8] sm:$0xff]
        %v401 = vld [vmem:[#allocation6 + $0x10] sm:$0xff]
        %v402 = vld [vmem:[#allocation6 + $0x18] sm:$0xff]
        %v403 = vlaneseq
        %v404 = vshrl.u32 %v403, 7
        %v405 = vsub.s32 0, %v404
        %v406 = vrot.slane %v398, %v405
        %v407 = vmul.f32 %v399, %v406
        %v408 = vmul.f32 %v400, %v406
        %v409 = vmul.f32 %v401, %v406
        %v410 = vmul.f32 %v402, %v406
        %v411 = vld [vmem:[%s322] sm:$0xff]
        %v412 = vld [vmem:[%s322 + $0x8] sm:$0xff]
        %v413 = vld [vmem:[%s322 + $0x10] sm:$0xff]
        %v414 = vld [vmem:[%s322 + $0x18] sm:$0xff]
        %v415 = vlaneseq
        %v416 = vshrl.u32 %v415, 7
        %v417 = vsub.s32 1, %v416
        %v418 = vrot.slane %v398, %v417
        %v419 = vmul.f32 %v411, %v418
        %v420 = vmul.f32 %v412, %v418
        %v421 = vmul.f32 %v413, %v418
        %v422 = vmul.f32 %v414, %v418
        %v423 = vadd.f32 %v407, %v419
        %v424 = vadd.f32 %v408, %v420
        %v425 = vadd.f32 %v409, %v421
        %v426 = vadd.f32 %v410, %v422
        %v427 = vld [vmem:[%s339] sm:$0xff]
        %v428 = vld [vmem:[%s339 + $0x8] sm:$0xff]
        %v429 = vld [vmem:[%s339 + $0x10] sm:$0xff]
        %v430 = vld [vmem:[%s339 + $0x18] sm:$0xff]
        %v431 = vlaneseq
        %v432 = vshrl.u32 %v431, 7
        %v433 = vsub.s32 2, %v432
        %v434 = vrot.slane %v398, %v433
        %v435 = vmul.f32 %v427, %v434
        %v436 = vmul.f32 %v428, %v434
        %v437 = vmul.f32 %v429, %v434
        %v438 = vmul.f32 %v430, %v434
        %v439 = vadd.f32 %v423, %v435
        %v440 = vadd.f32 %v424, %v436
        %v441 = vadd.f32 %v425, %v437
        %v442 = vadd.f32 %v426, %v438
        %v443 = vld [vmem:[%s356] sm:$0xff]
        %v444 = vld [vmem:[%s356 + $0x8] sm:$0xff]
        %v445 = vld [vmem:[%s356 + $0x10] sm:$0xff]
        %v446 = vld [vmem:[%s356 + $0x18] sm:$0xff]
        %v447 = vlaneseq
        %v448 = vshrl.u32 %v447, 7
        %v449 = vsub.s32 3, %v448
        %v450 = vrot.slane %v398, %v449
        %v451 = vmul.f32 %v443, %v450
        %v452 = vmul.f32 %v444, %v450
        %v453 = vmul.f32 %v445, %v450
        %v454 = vmul.f32 %v446, %v450
        %v455 = vadd.f32 %v439, %v451
        %v456 = vadd.f32 %v440, %v452
        %v457 = vadd.f32 %v441, %v453
        %v458 = vadd.f32 %v442, %v454
        %v459 = vld [vmem:[#allocation8] sm:$0xff]
        %v460 = vld [vmem:[#allocation8 + $0x8] sm:$0xff]
        %v461 = vld [vmem:[#allocation8 + $0x10] sm:$0xff]
        %v462 = vld [vmem:[#allocation8 + $0x18] sm:$0xff]
        %v463 = vadd.f32 %v455, %v459
        %v464 = vadd.f32 %v456, %v460
        %v465 = vadd.f32 %v457, %v461
        %v466 = vadd.f32 %v458, %v462
        %v467 = vmax.f32 %v463, 0.0
        %v468 = vmax.f32 %v464, 0.0
        %v469 = vmax.f32 %v465, 0.0
        %v470 = vmax.f32 %v466, 0.0
        %v471 = vld [vmem:[#allocation2] sm:$0xff]
        %v472 = vld [vmem:[#allocation2 + $0x8] sm:$0xff]
        %v473 = vld [vmem:[#allocation2 + $0x10] sm:$0xff]
        %v474 = vld [vmem:[#allocation2 + $0x18] sm:$0xff]
        %v475 = vadd.f32 %v471, %v467
        %v476 = vadd.f32 %v472, %v468
        %v477 = vadd.f32 %v473, %v469
        %v478 = vadd.f32 %v474, %v470
        %479 = vst [vmem:[#allocation2] sm:$0xff] %v475
        %480 = vst [vmem:[#allocation2 + $0x8] sm:$0xff] %v476
        %481 = vst [vmem:[#allocation2 + $0x10] sm:$0xff] %v477
        %482 = vst [vmem:[#allocation2 + $0x18] sm:$0xff] %v478
        // Predicated region
        $region61: #{tpu_custom_call.1} parent=39 // pred_check
          %p483 = pneg %p301
        $region62: #{tpu_custom_call.1} parent=39 // pred_check_branch
          %485 = sbr.rel (%p483) target = $region64
        $region63: #{tpu_custom_call.1} parent=39 // pred_region
          %v486 = vld [vmem:[#allocation2] sm:$0xff]
          %v487 = vld [vmem:[#allocation2 + $0x8] sm:$0xff]
          %v488 = vld [vmem:[#allocation2 + $0x10] sm:$0xff]
          %v489 = vld [vmem:[#allocation2 + $0x18] sm:$0xff]
          %490 = vadd.xlane.f32.xlu0 %v486
          %v491 = vpop.xlane.xlu0 %490
          %492 = vadd.xlane.f32.xlu0 %v487
          %v493 = vpop.xlane.xlu0 %492
          %494 = vadd.xlane.f32.xlu0 %v488
          %v495 = vpop.xlane.xlu0 %494
          %496 = vadd.xlane.f32.xlu0 %v489
          %v497 = vpop.xlane.xlu0 %496
          %v498 = vld [vmem:[#allocation9] sm:$0xff]
          %v499 = vld [vmem:[#allocation9 + $0x8] sm:$0xff]
          %v500 = vld [vmem:[#allocation9 + $0x10] sm:$0xff]
          %v501 = vld [vmem:[#allocation9 + $0x18] sm:$0xff]
          %v502 = vld [vmem:[%s4] sm:$0x1]
          %v507 = vlaneseq
          %v508 = vand.u32 %v507, 127
          %v509 = vlaneseq
          %v510 = vshrl.u32 %v509, 7
          %v511 = vsub.s32 %v508, %v510
          %v512 = vrot.slane %v491, %v511
          %v513 = vadd.s32 %v508, 4294967288
          %v514 = vlaneseq
          %v515 = vshrl.u32 %v514, 7
          %v516 = vsub.s32 %v513, %v515
          %v517 = vrot.slane %v493, %v516
          %vm518 = vcmask 130112
          %v519 = vsel %vm518, %v517, %v512
          %v520 = vadd.s32 %v508, 4294967280
          %v521 = vlaneseq
          %v522 = vshrl.u32 %v521, 7
          %v523 = vsub.s32 %v520, %v522
          %v524 = vrot.slane %v495, %v523
          %vm525 = vcmask 195712
          %v526 = vsel %vm525, %v524, %v519
          %v527 = vadd.s32 %v508, 4294967272
          %v528 = vlaneseq
          %v529 = vshrl.u32 %v528, 7
          %v530 = vsub.s32 %v527, %v529
          %v531 = vrot.slane %v497, %v530
          %vm532 = vcmask 261312
          %v533 = vsel %vm532, %v531, %v526
          %vm534 = vcmask 261120
          %v535 = vsel %vm534, %v533, 0
          %537 = vmatprep.subr.mxu0 0.0
          %538 = vmatpush1.msra.mxu0 0.0
          %539 = vmatprep.subr.mxu0 0.0
          %540 = vmatpush1.msra.mxu0 0.0
          %541 = vmatprep.subr.mxu0 0.0
          %542 = vmatpush1.msra.mxu0 0.0
          %543 = vmatprep.subr.mxu0 0.0
          %544 = vmatpush1.msra.mxu0 0.0
          %545 = vmatprep.subr.mxu0 0.0
          %546 = vmatpush1.msra.mxu0 0.0
          %547 = vmatprep.subr.mxu0 0.0
          %548 = vmatpush1.msra.mxu0 0.0
          %549 = vmatprep.subr.mxu0 0.0
          %550 = vmatpush1.msra.mxu0 0.0
          %551 = vmatprep.subr.mxu0 0.0
          %552 = vmatpush1.msra.mxu0 0.0
          %553 = vmatprep.subr.mxu0 0.0
          %554 = vmatpush1.msra.mxu0 0.0
          %555 = vmatprep.subr.mxu0 0.0
          %556 = vmatpush1.msra.mxu0 0.0
          %557 = vmatprep.subr.mxu0 0.0
          %558 = vmatpush1.msra.mxu0 0.0
          %559 = vmatprep.subr.mxu0 0.0
          %560 = vmatpush1.msra.mxu0 0.0
          %561 = vmatprep.subr.mxu0 0.0
          %562 = vmatpush1.msra.mxu0 %v501
          %563 = vmatprep.subr.mxu0 0.0
          %564 = vmatpush1.msra.mxu0 %v500
          %565 = vmatprep.subr.mxu0 0.0
          %566 = vmatpush1.msra.mxu0 %v499
          %567 = vmatprep.subr.mxu0 0.0
          %568 = vmatpush1.msra.mxu0 %v498
          %569 = vmatprep.subr.mxu0 0.0
          %570 = vmatpush2.msra.mxu0 0.0
          %571 = vmatprep.subr.mxu0 0.0
          %572 = vmatpush2.msra.mxu0 0.0
          %573 = vmatprep.subr.mxu0 0.0
          %574 = vmatpush2.msra.mxu0 0.0
          %575 = vmatprep.subr.mxu0 0.0
          %576 = vmatpush2.msra.mxu0 0.0
          %577 = vmatprep.subr.mxu0 0.0
          %578 = vmatpush2.msra.mxu0 0.0
          %579 = vmatprep.subr.mxu0 0.0
          %580 = vmatpush2.msra.mxu0 0.0
          %581 = vmatprep.subr.mxu0 0.0
          %582 = vmatpush2.msra.mxu0 0.0
          %583 = vmatprep.subr.mxu0 0.0
          %584 = vmatpush2.msra.mxu0 0.0
          %585 = vmatprep.subr.mxu0 0.0
          %586 = vmatpush2.msra.mxu0 0.0
          %587 = vmatprep.subr.mxu0 0.0
          %588 = vmatpush2.msra.mxu0 0.0
          %589 = vmatprep.subr.mxu0 0.0
          %590 = vmatpush2.msra.mxu0 0.0
          %591 = vmatprep.subr.mxu0 0.0
          %592 = vmatpush2.msra.mxu0 0.0
          %593 = vmatprep.subr.mxu0 0.0
          %594 = vmatpush2.msra.mxu0 0.0
          %595 = vmatprep.subr.mxu0 0.0
          %596 = vmatpush2.msra.mxu0 0.0
          %597 = vmatprep.subr.mxu0 0.0
          %598 = vmatpush2.msra.mxu0 0.0
          %599 = vmatprep.subr.mxu0 0.0
          %600 = vmatpush2.msra.mxu0 0.0
          %601 = vmatprep.mubr.f32.mxu0 0.0
          %602 = vmatmul.mubr.f32.gmra.mxu0 %v535
          %v603 = vpop.f32.mrf.mxu0
          %v604 = vadd.f32 %v502, %v603
          %v605 = vpop.f32.mrf.mxu0
          %606 = vdwg.mxu0
          %607 = vst [vmem:[%s299] sm:$0x1] %v604
        $region64: #{tpu_custom_call.1} parent=39 // pred_fallthru
          _
        %s608 = sand.u32 %s156, 1
        %s609 = scalar_lea.sflag [#allocation5], %s608
        %s610 = sand.u32 %s156, 1
        %s611 = scalar_lea.vmem [#allocation11], %s610
        // Predicated region
        $region65: #{tpu_custom_call.1} parent=39 // pred_check
          %p612 = pneg %p166
        $region66: #{tpu_custom_call.1} parent=39 // pred_check_branch
          %614 = sbr.rel (%p612) target = $region68
        $region67: #{tpu_custom_call.1} parent=39 // pred_region
          %s616 = ssub.s32 16, 16
          %617 = vsyncadd %s609, %s616
          %s618 = smul.addr %s28, 16
          %s619 = scalar_lea.hbm %s5, %s618
          %s621 = sshll.u32 %s611, 4
          %s622 = int_to_ptr.vmem [resolvable:$true] %s621
          %624 = dma.vmem_to_hbm [thread:$0]  %s622, 16, %s619, %s609
        $region68: #{tpu_custom_call.1} parent=39 // pred_fallthru
          _
      $region40: #{tpu_custom_call.1} parent=5 // pred_fallthru
        _
      %p625 = scmp.le.s32.totalorder 2, %s19
      // Predicated region
      $region69: #{tpu_custom_call.1} parent=5 // pred_check
        %p626 = pneg %p625
      $region70: #{tpu_custom_call.1} parent=5 // pred_check_branch
        %628 = sbr.rel (%p626) target = $region72
      $region71: #{tpu_custom_call.1} parent=5 // pred_region
        %s629 = ssub.s32 %s19, 2
        // Predicated region
        $region73: #{tpu_custom_call.1} parent=71 // pred_check
          %p630 = pneg %p172
        $region74: #{tpu_custom_call.1} parent=71 // pred_check_branch
          %632 = sbr.rel (%p630) target = $region76
        $region75: #{tpu_custom_call.1} parent=71 // pred_region
          %s633 = sand.u32 %s157, 1
          %s634 = scalar_lea.sflag [#allocation5], %s633
          %s635 = sand.u32 %s157, 1
          %s636 = scalar_lea.vmem [#allocation11], %s635
          %637 = dma.done %s634, 16
        $region76: #{tpu_custom_call.1} parent=71 // pred_fallthru
          _
      $region72: #{tpu_custom_call.1} parent=5 // pred_fallthru
        _
    $region6: #{tpu_custom_call.1} parent=1 // loop_footer
      %s23 = sadd.s32 1, %s19
    $region7: #{tpu_custom_call.1} parent=1 // loop_footer_branch
      %18 = sbr.rel target = $region3
    $region8: #{tpu_custom_call.1} parent=1 // loop_exit
      _
    %638 = vsyncpa [#allocation4], 1
    %s639 = scalar_lea.sflag [#allocation4], 1
    %640 = vsyncpa %s639, 1
    %641 = vsyncpa [#allocation7], 1
    %642 = vsyncpa [#allocation10], 1
    %643 = vsyncpa [#allocation5], 1
    %s644 = scalar_lea.sflag [#allocation5], 1
    %645 = vsyncpa %s644, 1

</llo_original>
